<compile_context>
chip_gen: v6e
topology: v6e:2x2x1
jax: 0.10.0
libtpu: 0.0.40
codegen_flags: <defaults>
</compile_context>

<pallas_src>
import functools
import math

import numpy as np
import jax
import jax.numpy as jnp
from jax.experimental import pallas as pl
from jax.experimental.pallas import tpu as pltpu


def _round_up(x: int, m: int) -> int:
    return ((x + m - 1) // m) * m


def _is_dual_tc() -> bool:
    # v7x has 2 TensorCores per chip ("parallel" grid axes are sharded across
    # them); v5e/v6e have a single TC so the grid is just a serial loop.
    try:
        kind = jax.devices()[0].device_kind.lower()
    except Exception:
        return False
    return "7" in kind


@functools.lru_cache(maxsize=32)
def _pe_table(seq_len: int, d_model: int, dtype_str: str) -> jax.Array:
    """Sinusoid table exactly like the PyTorch buffer: float64 math -> float32.

    Cached per (seq_len, d_model, dtype) like register_buffer, so repeated calls
    pay neither the host sin/cos nor the H2D upload.
    """
    position = np.arange(0, seq_len, dtype=np.float64)[:, None]
    div_term = np.exp(
        np.arange(0, d_model, 2, dtype=np.float64) * (-math.log(10000.0) / d_model))
    pe = np.zeros((seq_len, d_model), dtype=np.float64)
    pe[:, 0::2] = np.sin(position * div_term)
    pe[:, 1::2] = np.cos(position * div_term)
    # TODO(synk): for non-f32 x PyTorch promotes against the f32 buffer; here PE
    # is cast to x.dtype, so low-order bits can differ for bf16 inputs.
    return jnp.asarray(pe.astype(np.float32), dtype=jnp.dtype(dtype_str))


def _add_pe_3d_kernel(x_ref, pe_ref, o_ref):
    # x: (tS, B, D), pe: (tS, 1, D) -> broadcast over the batch (sublane) dim.
    o_ref[...] = (x_ref[...] + pe_ref[...]).astype(o_ref.dtype)


def _add_pe_2d_kernel(x_ref, pe_ref, o_ref, *, batch: int):
    # x: (tS, B*D), pe: (tS, D).  Tile PE across batch on-chip (free filler
    # under the HBM roofline) instead of materializing an S*B*D copy in HBM
    # and reading it at full x bandwidth.
    pe = pe_ref[...]
    if batch > 1:
        pe = jnp.tile(pe, (1, batch))
    o_ref[...] = (x_ref[...] + pe).astype(o_ref.dtype)


def _choose_seq_tile(S: int, row_bytes: int, align: int, dual_tc: bool,
                     target_bytes: int) -> int:
    """Largest seq tile (multiple of `align`) whose x block fits the target."""
    if S <= align:
        return S
    tile = max(align, (int(target_bytes // row_bytes) // align) * align)
    if tile >= S:
        return S  # single block = fewest grid steps (per-step cost ~0.35 us)
    steps = pl.cdiv(S, tile)
    if dual_tc and steps % 2 == 1:
        # v7x: make the step count even so the two TensorCores get balanced work.
        tile = max(align, _round_up(pl.cdiv(S, steps + 1), align))
    return tile


def positional_encoding(x: jax.Array) -> jax.Array:
    """x: (seq_len, batch, d_model) -> same shape with sinusoidal PE added."""
    S, B, D = x.shape
    assert D % 2 == 0, "d_model must be even (as in the PyTorch module)"
    itemsize = jnp.dtype(x.dtype).itemsize
    pe = _pe_table(S, D, str(jnp.dtype(x.dtype)))  # (S, D) cached device buffer

    dual_tc = _is_dual_tc()
    # Per-TC VMEM: 64 MiB on v7x, 128 MiB on v5e/v6e.  Keep headroom below that.
    vmem_cap = (56 << 20) if dual_tc else (96 << 20)

    dense_3d = (D % 128 == 0)
    if dense_3d:
        # (seq_tile, B, D) blocks are legal for ANY B (block dims equal to the
        # full array dims satisfy the (8,128) rule); B only pads to 8 in VMEM,
        # HBM traffic stays exact and the PE stream is 1/B of the x traffic.
        x_in = x
        pe_in = pe.reshape(S, 1, D)
        kernel = _add_pe_3d_kernel
        x_bufs, tmp_bufs = 4, 0                      # 2x in + 2x out (double-buffered)
        row_bytes = _round_up(B, 8) * D * itemsize   # VMEM-padded bytes per seq row
        target = (vmem_cap - (2 << 20)) // (x_bufs + tmp_bufs + 2)
        seq_tile = _choose_seq_tile(S, row_bytes, 1, dual_tc, target)
        x_spec = pl.BlockSpec((seq_tile, B, D), lambda i: (i, 0, 0))
        pe_spec = pl.BlockSpec((seq_tile, 1, D), lambda i: (i, 0, 0))
        out_shape = jax.ShapeDtypeStruct((S, B, D), x.dtype)
        x_vmem = seq_tile * _round_up(B, 8) * D * itemsize
        pe_vmem = seq_tile * 8 * D * itemsize        # (tS,1,D): sublane dim 1 -> 8
    else:
        # Lane-dense fallback for unaligned d_model: flatten (B, D) into the
        # lane axis so stores are unmasked; PE stays (S, D) in HBM and is tiled
        # across batch inside the kernel.
        x_in = x.reshape(S, B * D)
        pe_in = pe
        kernel = functools.partial(_add_pe_2d_kernel, batch=B)
        x_bufs, tmp_bufs = 4, 1                      # +1: in-kernel tile temp may hit VMEM
        lanes = _round_up(B * D, 128)
        row_bytes = lanes * itemsize
        target = (vmem_cap - (2 << 20)) // (x_bufs + tmp_bufs + 2)
        align = 8 if S >= 8 else S
        seq_tile = _choose_seq_tile(S, row_bytes, align, dual_tc, target)
        x_spec = pl.BlockSpec((seq_tile, B * D), lambda i: (i, 0))
        pe_spec = pl.BlockSpec((seq_tile, D), lambda i: (i, 0))
        out_shape = jax.ShapeDtypeStruct((S, B * D), x.dtype)
        x_vmem = _round_up(seq_tile, 8) * lanes * itemsize
        pe_vmem = _round_up(seq_tile, 8) * _round_up(D, 128) * itemsize

    # Floor of 32 MiB lifts v5e's 16 MiB scoped-VMEM default; cap stays below
    # the physical per-TC VMEM for the detected generation.
    vmem_limit = int(min(max((x_bufs + tmp_bufs) * x_vmem + 2 * pe_vmem + (2 << 20),
                             32 << 20),
                         vmem_cap))

    out = pl.pallas_call(
        kernel,
        out_shape=out_shape,
        grid_spec=pltpu.PrefetchScalarGridSpec(
            num_scalar_prefetch=0,
            grid=(pl.cdiv(S, seq_tile),),
            in_specs=[x_spec, pe_spec],
            out_specs=x_spec,
        ),
        # Elementwise, in-place-able.  (Caller must donate x under jit for the
        # alias to avoid a defensive copy.)
        input_output_aliases={0: 0},
        compiler_params=pltpu.CompilerParams(
            dimension_semantics=("parallel",),
            vmem_limit_bytes=vmem_limit,
        ),
    )(x_in, pe_in)

    # TODO(synk): training-mode dropout (p=0.1 + 1/(1-p) rescale) not implemented;
    # this reproduces eval-mode (identity) dropout of the PyTorch module.
    if not dense_3d:
        out = out.reshape(S, B, D)
    return out


def _reference(x_np: np.ndarray) -> np.ndarray:
    """NumPy reference mirroring the PyTorch buffer construction (float64 table)."""
    S, B, D = x_np.shape
    position = np.arange(0, S, dtype=np.float64)[:, None]
    div_term = np.exp(np.arange(0, D, 2, dtype=np.float64) * (-math.log(10000.0) / D))
    pe = np.zeros((S, D), dtype=np.float64)
    pe[:, 0::2] = np.sin(position * div_term)
    pe[:, 1::2] = np.cos(position * div_term)
    return x_np + pe.astype(np.float32)[:, None, :]  # (S,1,D) broadcast over batch


if __name__ == "__main__":
    k1, k2 = jax.random.split(jax.random.PRNGKey(0))

    # 2D lane-dense path (d_model not a multiple of 128): seq=8, batch=2, hidden=32.
    S, B, D = 8, 2, 32
    x = jax.random.normal(k1, (S, B, D), dtype=jnp.float32)
    x_np = np.asarray(x)  # snapshot before the (aliased) kernel call
    out = jax.block_until_ready(positional_encoding(x))
    assert out.shape == x_np.shape and out.dtype == jnp.float32
    np.testing.assert_allclose(np.asarray(out), _reference(x_np), rtol=1e-6, atol=1e-6)

    # 3D broadcast path (d_model % 128 == 0; odd batch exercises the widened gate).
    S2, B2, D2 = 16, 3, 128
    x2 = jax.random.normal(k2, (S2, B2, D2), dtype=jnp.float32)
    x2_np = np.asarray(x2)
    out2 = jax.block_until_ready(positional_encoding(x2))
    assert out2.shape == x2_np.shape and out2.dtype == jnp.float32
    np.testing.assert_allclose(np.asarray(out2), _reference(x2_np), rtol=1e-6, atol=1e-6)

    print("KERNEL_OK")
</pallas_src>

<mosaic_0001>
module attributes {stable_mosaic.version = 11 : i64} {
  func.func @_add_pe_2d_kernel(%arg0: i32, %arg1: memref<8x64xf32, #tpu.memory_space<vmem>>, %arg2: memref<8x32xf32, #tpu.memory_space<vmem>>, %arg3: memref<8x64xf32, #tpu.memory_space<vmem>>) attributes {dimension_semantics = [#tpu.dimension_semantics<parallel>], iteration_bounds = array<i64: 1>, scalar_prefetch = 0 : i64, scratch_operands = 0 : i64, tpu.core_type = #tpu.core_type<tc>, window_params = [{transform_indices = @transform_0, window_bounds = array<i64: 8, 64>}, {transform_indices = @transform_1, window_bounds = array<i64: 8, 32>}, {transform_indices = @transform_2, window_bounds = array<i64: 8, 64>}]} {
    %c0 = arith.constant 0 : index
    %c0_0 = arith.constant 0 : index
    %0 = vector.load %arg2[%c0, %c0_0] : memref<8x32xf32, #tpu.memory_space<vmem>>, vector<8x32xf32>
    %1 = tpu.concatenate %0, %0 in 1 : vector<8x32xf32>, vector<8x32xf32> -> vector<8x64xf32>
    %c0_1 = arith.constant 0 : index
    %c0_2 = arith.constant 0 : index
    %2 = vector.load %arg1[%c0_1, %c0_2] : memref<8x64xf32, #tpu.memory_space<vmem>>, vector<8x64xf32>
    %3 = arith.addf %2, %1 : vector<8x64xf32>
    %c0_3 = arith.constant 0 : index
    %c0_4 = arith.constant 0 : index
    %4 = vector.load %arg3[%c0_3, %c0_4] : memref<8x64xf32, #tpu.memory_space<vmem>>, vector<8x64xf32>
    tpu.vector_store %arg3[%c0_3, %c0_4], %3 {strides = array<i32>} : memref<8x64xf32, #tpu.memory_space<vmem>>, vector<8x64xf32>,
    return
  }
  func.func @transform_0(%arg0: i32) -> (i32, i32) {
    %c0_i32 = arith.constant 0 : i32
    %c0_i32_0 = arith.constant 0 : i32
    return %arg0, %c0_i32 : i32, i32
  }
  func.func @transform_1(%arg0: i32) -> (i32, i32) {
    %c0_i32 = arith.constant 0 : i32
    %c0_i32_0 = arith.constant 0 : i32
    return %arg0, %c0_i32 : i32, i32
  }
  func.func @transform_2(%arg0: i32) -> (i32, i32) {
    %c0_i32 = arith.constant 0 : i32
    %c0_i32_0 = arith.constant 0 : i32
    return %arg0, %c0_i32 : i32, i32
  }
}

</mosaic_0001>

<llo_original>
// kernel: tpu_custom_call.1
$region0: #{tpu_custom_call.1}
  #allocation0 [shape = 'u32[]', space=smem, size = 0x4, offset = 0x4, fixed_abs, tag = 'smem constant byte address 0x4 - core index']
  #allocation1 [shape = 'u32[144,128]{1,0:T(1,128)}', space=vmem, size = 0x12000, scoped, tag = 'internal scratch']
  %s0 = inlined_call_operand.hbm [shape: f32[8,64], index: 0, kind: input, shape index: {}, may-alias: {0,2}]
  %s1 = inlined_call_operand.vmem [shape: f32[8,32], index: 1, kind: input, shape index: {}]
  %s2 = inlined_call_operand.hbm [shape: f32[8,64], index: 2, kind: output, shape index: {}, may-alias: {0,2}]
  %s3 = sld [smem:[#allocation0]]
  $region22: #{tpu_custom_call.1} parent=0
    _
  %s5 = ssub.s32 1, %s3
  %s6 = scalar_select 0, %s5, %s3
  $region1: #{tpu_custom_call.1} parent=0
    #allocation2 [shape = 'u8[4096]{0}', space=vmem, size = 0x1000, scoped, tag = 'input window, operand 0, single buffered']
    #allocation3 [shape = 's32[1]{0}', space=sflag, size = 0x4, scoped, tag = 'scoped memory for tpu_custom_call.1']
    #allocation4 [shape = 's32[1]{0}', space=sflag, size = 0x4, scoped, tag = 'scoped memory for tpu_custom_call.1']
    #allocation5 [shape = 'u8[4096]{0}', space=vmem, size = 0x1000, scoped, tag = 'output window, operand 0, single buffered']
    %7 = vsyncpa [#allocation3], 0
    %8 = vsyncpa [#allocation4], 0
    // Predicated region
    $region2: #{tpu_custom_call.1} parent=1 // pred_check
      _
    $region3: #{tpu_custom_call.1} parent=1 // pred_check_branch
      %10 = sbr.rel (0) target = $region5
    $region4: #{tpu_custom_call.1} parent=1 // pred_region
      %s12 = ssub.s32 128, 128
      %13 = vsyncadd [#allocation3], %s12
      %s15 = sshll.u32 [#allocation2], 4
      %s16 = int_to_ptr.vmem [resolvable:$true] %s15
      %18 = dma.hbm_to_vmem [thread:$0]  %s0, 128, %s16, [#allocation3]
    $region5: #{tpu_custom_call.1} parent=1 // pred_fallthru
      _
    // Predicated region
    $region6: #{tpu_custom_call.1} parent=1 // pred_check
      _
    $region7: #{tpu_custom_call.1} parent=1 // pred_check_branch
      %20 = sbr.rel (0) target = $region9
    $region8: #{tpu_custom_call.1} parent=1 // pred_region
      _
    $region9: #{tpu_custom_call.1} parent=1 // pred_fallthru
      _
    // Predicated region
    $region10: #{tpu_custom_call.1} parent=1 // pred_check
      _
    $region11: #{tpu_custom_call.1} parent=1 // pred_check_branch
      %22 = sbr.rel (0) target = $region13
    $region12: #{tpu_custom_call.1} parent=1 // pred_region
      %23 = dma.done [#allocation3], 128
    $region13: #{tpu_custom_call.1} parent=1 // pred_fallthru
      _
    %v24 = vld [vmem:[%s1] sm:$0xff]
    %26 = vrot.lane.b32.xlu0 %v24, 32
    %v27 = vpop.permute.xlu0 %26
    %vm29 = vcmask 261120
    %v30 = vsel %vm29, %v24, %v27
    %v31 = vld [vmem:[#allocation2] sm:$0xff]
    %v32 = vadd.f32 %v31, %v30
    %vm33 = vcmask 523264
    %34 = vst.msk [vmem:[#allocation5] sm:$0xff] %vm33, %v32
    // Predicated region
    $region14: #{tpu_custom_call.1} parent=1 // pred_check
      _
    $region15: #{tpu_custom_call.1} parent=1 // pred_check_branch
      %36 = sbr.rel (0) target = $region17
    $region16: #{tpu_custom_call.1} parent=1 // pred_region
      %s38 = ssub.s32 128, 128
      %39 = vsyncadd [#allocation4], %s38
      %s41 = sshll.u32 [#allocation5], 4
      %s42 = int_to_ptr.vmem [resolvable:$true] %s41
      %44 = dma.vmem_to_hbm [thread:$0]  %s42, 128, %s2, [#allocation4]
    $region17: #{tpu_custom_call.1} parent=1 // pred_fallthru
      _
    // Predicated region
    $region18: #{tpu_custom_call.1} parent=1 // pred_check
      _
    $region19: #{tpu_custom_call.1} parent=1 // pred_check_branch
      %46 = sbr.rel (0) target = $region21
    $region20: #{tpu_custom_call.1} parent=1 // pred_region
      %47 = dma.done [#allocation4], 128
    $region21: #{tpu_custom_call.1} parent=1 // pred_fallthru
      _
    %48 = vsyncpa [#allocation3], 1
    %49 = vsyncpa [#allocation4], 1

</llo_original>
